<compile_context>
chip_gen: v5e
topology: v5e:2x2
jax: 0.10.0
libtpu: 0.0.40
codegen_flags: <defaults>
</compile_context>

<pallas_src>
import functools

import jax
import jax.numpy as jnp
from jax.experimental import pallas as pl
from jax.experimental.pallas import tpu as pltpu

LANE = 128      # f32 lane width (last dim)
SUBLANE = 8     # f32 sublane width (second-to-last dim)


def _round_up(n, m):
    return ((n + m - 1) // m) * m


def _pad_2d(a, rows, cols):
    return jnp.pad(a, ((0, rows - a.shape[0]), (0, cols - a.shape[1])))


# ----------------------------------------------------------------------------
# Fused Pallas kernel: whole BetaVAE forward in one pallas_call.
# ----------------------------------------------------------------------------
def _fused_vae_kernel(xe_ref, w_ref, b_ref, wh_ref, bh_ref, out_ref, *,
                      enc_p, dec_p, d_in_p, lat_p):
    """Inputs:
        xe_ref : (Bp, d_in_p + lat_p)        [x | eps] slab
        w_ref  : (n_enc+n_dec, Kmax, Nmax)   stacked zero-padded weights
        b_ref  : (n_enc+n_dec, 1, Nmax)      stacked biases (f32)
        wh_ref : (Hp, 2*lat_p)               [fc_mu | fc_logvar] weights
        bh_ref : (1, 2*lat_p)                [fc_mu | fc_logvar] biases
       Output:
        out_ref: (Bp, d_out_p + 3*lat_p)     [recon | mu | logvar | z] slab
    """
    n_enc = len(enc_p) - 1
    n_dec = len(dec_p) - 1
    d_out_p = dec_p[-1]

    # static, 128-lane-aligned slices of the fused input slab
    x = xe_ref[:, :d_in_p]
    eps = xe_ref[:, d_in_p:d_in_p + lat_p]

    mm_dtype = w_ref.dtype   # bf16 path: cast only at the MXU inputs

    # ---- encoder: fused Linear + ReLU, activations stay in vregs ----
    h = x
    for i in range(n_enc):
        k, n = enc_p[i], enc_p[i + 1]
        w = w_ref[i, :k, :n]
        b = b_ref[i, :, :n]
        h = jnp.maximum(
            jnp.dot(h.astype(mm_dtype), w, preferred_element_type=jnp.float32) + b,
            0.0)

    # ---- mu / logvar heads fused into a single MXU matmul ----
    heads = (jnp.dot(h.astype(wh_ref.dtype), wh_ref[...],
                     preferred_element_type=jnp.float32) + bh_ref[...])
    mu = heads[:, :lat_p]                     # static slices on 128-lane boundaries
    logvar = heads[:, lat_p:2 * lat_p]

    # ---- reparameterization: z = mu + eps * exp(0.5 * logvar) (f32, EUP) ----
    z = mu + eps * jnp.exp(0.5 * logvar)

    # ---- decoder: Linear + ReLU ... Linear + Sigmoid ----
    d = z
    for i in range(n_dec):
        k, n = dec_p[i], dec_p[i + 1]
        w = w_ref[n_enc + i, :k, :n]
        b = b_ref[n_enc + i, :, :n]
        y = jnp.dot(d.astype(mm_dtype), w, preferred_element_type=jnp.float32) + b
        d = jnp.maximum(y, 0.0) if i < n_dec - 1 else jax.nn.sigmoid(y)

    # ---- one lane-dense output slab -> single writeback DMA ----
    out_ref[:, :d_out_p] = d.astype(out_ref.dtype)
    out_ref[:, d_out_p:d_out_p + lat_p] = mu.astype(out_ref.dtype)
    out_ref[:, d_out_p + lat_p:d_out_p + 2 * lat_p] = logvar.astype(out_ref.dtype)
    out_ref[:, d_out_p + 2 * lat_p:d_out_p + 3 * lat_p] = z.astype(out_ref.dtype)


# ----------------------------------------------------------------------------
# Factory: init padded params + build forward closure over static dims.
# ----------------------------------------------------------------------------
def make_beta_vae(key, input_dim, hidden_dims, latent_dim, *,
                  dtype=jnp.float32, weights_dtype=jnp.float32):
    """Returns (params, forward, raw_params).

    params:     jnp-array pytree of padded, stacked slabs (kernel operands).
    forward:    forward(params, x, eps) -> (recon_x, mu, logvar, z).
    raw_params: unpadded f32 weights for the pure-JAX reference check.
    """
    def linear_init(k, fan_in, fan_out):
        kw, kb = jax.random.split(k)
        scale = 1.0 / jnp.sqrt(jnp.asarray(fan_in, dtype))
        w = jax.random.normal(kw, (fan_in, fan_out), dtype) * scale
        b = jax.random.normal(kb, (fan_out,), dtype) * scale
        return w, b

    enc_dims = [input_dim] + list(hidden_dims)
    dec_dims = [latent_dim] + list(hidden_dims)[::-1] + [input_dim]
    n_enc = len(enc_dims) - 1
    n_dec = len(dec_dims) - 1
    keys = iter(jax.random.split(key, n_enc + 2 + n_dec))

    raw = {"enc": [], "dec": []}
    for i in range(n_enc):
        raw["enc"].append(linear_init(next(keys), enc_dims[i], enc_dims[i + 1]))
    raw["mu"] = linear_init(next(keys), hidden_dims[-1], latent_dim)
    raw["logvar"] = linear_init(next(keys), hidden_dims[-1], latent_dim)
    for i in range(n_dec):
        raw["dec"].append(linear_init(next(keys), dec_dims[i], dec_dims[i + 1]))

    # ---- padded (static) dims ----
    enc_p = tuple(_round_up(d, LANE) for d in enc_dims)
    dec_p = tuple(_round_up(d, LANE) for d in dec_dims)
    d_in_p, hid_p = enc_p[0], enc_p[-1]
    lat_p, d_out_p = dec_p[0], dec_p[-1]
    k_max = max(enc_p[:-1] + dec_p[:-1])
    n_max = max(enc_p[1:] + dec_p[1:])
    n_layers = n_enc + n_dec

    # ---- stack all enc+dec weights/biases into single zero-padded slabs ----
    w_stack = jnp.zeros((n_layers, k_max, n_max), weights_dtype)
    b_stack = jnp.zeros((n_layers, 1, n_max), jnp.float32)
    layers = list(raw["enc"]) + list(raw["dec"])
    for i, (w, b) in enumerate(layers):
        w_stack = w_stack.at[i, :w.shape[0], :w.shape[1]].set(w.astype(weights_dtype))
        b_stack = b_stack.at[i, 0, :b.shape[0]].set(b.astype(jnp.float32))

    # ---- fc_mu | fc_logvar fused head slab ----
    w_heads = jnp.concatenate(
        [_pad_2d(raw["mu"][0], hid_p, lat_p), _pad_2d(raw["logvar"][0], hid_p, lat_p)],
        axis=1).astype(weights_dtype)
    b_heads = jnp.concatenate(
        [_pad_2d(raw["mu"][1][None, :], 1, lat_p),
         _pad_2d(raw["logvar"][1][None, :], 1, lat_p)], axis=1).astype(jnp.float32)

    params = {"w_stack": w_stack, "b_stack": b_stack,
              "w_heads": w_heads, "b_heads": b_heads}

    kernel = functools.partial(_fused_vae_kernel, enc_p=enc_p, dec_p=dec_p,
                               d_in_p=d_in_p, lat_p=lat_p)

    mm_flops = 2 * (sum(enc_p[i] * enc_p[i + 1] for i in range(n_enc))
                    + hid_p * 2 * lat_p
                    + sum(dec_p[i] * dec_p[i + 1] for i in range(n_dec)))

    def forward(params, x, eps):
        B = x.shape[0]
        if x.ndim > 2:                      # flatten NCHW -> (B, D), plain-JAX glue
            x = x.reshape(B, -1)
        Bp = _round_up(max(B, SUBLANE), SUBLANE)

        # single fused [x | eps] input slab (jnp.pad, no zeros+scatter)
        x_pad = _pad_2d(x, Bp, d_in_p)
        eps_pad = _pad_2d(eps, Bp, lat_p)
        xe = jnp.concatenate([x_pad, eps_pad], axis=1)

        out_width = d_out_p + 3 * lat_p
        w_s, b_s = params["w_stack"], params["b_stack"]
        w_h, b_h = params["w_heads"], params["b_heads"]
        bytes_accessed = (xe.size * xe.dtype.itemsize
                          + w_s.size * w_s.dtype.itemsize
                          + b_s.size * b_s.dtype.itemsize
                          + w_h.size * w_h.dtype.itemsize
                          + b_h.size * b_h.dtype.itemsize
                          + Bp * out_width * 4)

        vmem = pl.BlockSpec(memory_space=pltpu.MemorySpace.VMEM)
        out = pl.pallas_call(
            kernel,
            out_shape=jax.ShapeDtypeStruct((Bp, out_width), x.dtype),
            in_specs=[vmem] * 5,
            out_specs=vmem,
            cost_estimate=pl.CostEstimate(
                flops=Bp * mm_flops,
                transcendentals=Bp * (lat_p + d_out_p),
                bytes_accessed=bytes_accessed),
        )(xe, w_s, b_s, w_h, b_h)

        recon_x = out[:B, :input_dim]
        mu = out[:B, d_out_p:d_out_p + latent_dim]
        logvar = out[:B, d_out_p + lat_p:d_out_p + lat_p + latent_dim]
        z = out[:B, d_out_p + 2 * lat_p:d_out_p + 2 * lat_p + latent_dim]
        return recon_x, mu, logvar, z

    return params, forward, raw


# ----------------------------------------------------------------------------
# Pure-JAX reference (for correctness check only)
# ----------------------------------------------------------------------------
def beta_vae_reference(raw, x, eps):
    if x.ndim > 2:
        x = x.reshape(x.shape[0], -1)
    h = x
    for w, b in raw["enc"]:
        h = jnp.maximum(h @ w + b, 0.0)
    mu = h @ raw["mu"][0] + raw["mu"][1]
    logvar = h @ raw["logvar"][0] + raw["logvar"][1]
    z = mu + eps * jnp.exp(0.5 * logvar)
    d = z
    n_dec = len(raw["dec"])
    for i, (w, b) in enumerate(raw["dec"]):
        y = d @ w + b
        d = jnp.maximum(y, 0.0) if i < n_dec - 1 else jax.nn.sigmoid(y)
    return d, mu, logvar, z


# ----------------------------------------------------------------------------
# Main
# ----------------------------------------------------------------------------
if __name__ == "__main__":
    # Small shapes consistent with the module's forward:
    # input image (B, C, H, W) = (2, 1, 8, 8) -> input_dim = 64
    batch = 2
    input_dim = 64
    hidden_dims = [32, 16]
    latent_dim = 8

    root = jax.random.PRNGKey(0)
    k_params, k_x, k_eps = jax.random.split(root, 3)

    # weights_dtype=jnp.bfloat16 halves weight-DMA bytes and hits the native
    # MXU rate on v6e/v7x; kept f32 here so numerics match PyTorch exactly.
    params, forward, raw_params = make_beta_vae(
        k_params, input_dim, hidden_dims, latent_dim, weights_dtype=jnp.float32)

    x = jax.random.normal(k_x, (batch, 1, 8, 8), jnp.float32)
    # eps ~ N(0,1): the randomness of torch.randn_like, made deterministic here.
    eps = jax.random.normal(k_eps, (batch, latent_dim), jnp.float32)

    fwd = jax.jit(forward)
    recon_x, mu, logvar, z = fwd(params, x, eps)
    jax.block_until_ready((recon_x, mu, logvar, z))

    assert recon_x.shape == (batch, input_dim)
    assert mu.shape == (batch, latent_dim)
    assert logvar.shape == (batch, latent_dim)
    assert z.shape == (batch, latent_dim)

    # Correctness: fused Pallas kernel vs pure-JAX reference.
    r_ref, mu_ref, lv_ref, z_ref = beta_vae_reference(raw_params, x, eps)
    assert jnp.allclose(recon_x, r_ref, atol=1e-5, rtol=1e-5)
    assert jnp.allclose(mu, mu_ref, atol=1e-5, rtol=1e-5)
    assert jnp.allclose(logvar, lv_ref, atol=1e-5, rtol=1e-5)
    assert jnp.allclose(z, z_ref, atol=1e-5, rtol=1e-5)

    print("KERNEL_OK")
</pallas_src>

<mosaic_0001>
module attributes {stable_mosaic.version = 11 : i64} {
  func.func @_fused_vae_kernel(%arg0: memref<8x256xf32, #tpu.memory_space<vmem>>, %arg1: memref<5x128x128xf32, #tpu.memory_space<vmem>>, %arg2: memref<5x1x128xf32, #tpu.memory_space<vmem>>, %arg3: memref<128x256xf32, #tpu.memory_space<vmem>>, %arg4: memref<1x256xf32, #tpu.memory_space<vmem>>, %arg5: memref<8x512xf32, #tpu.memory_space<vmem>>) attributes {dimension_semantics = [], scalar_prefetch = 0 : i64, scratch_operands = 0 : i64, tpu.core_type = #tpu.core_type<tc>} {
    %c0 = arith.constant 0 : index
    %c0_0 = arith.constant 0 : index
    %0 = vector.load %arg0[%c0, %c0_0] : memref<8x256xf32, #tpu.memory_space<vmem>>, vector<8x128xf32>
    %c0_1 = arith.constant 0 : index
    %c128 = arith.constant 128 : index
    %1 = vector.load %arg0[%c0_1, %c128] : memref<8x256xf32, #tpu.memory_space<vmem>>, vector<8x128xf32>
    %c0_2 = arith.constant 0 : index
    %c0_3 = arith.constant 0 : index
    %c0_4 = arith.constant 0 : index
    %2 = vector.load %arg1[%c0_2, %c0_3, %c0_4] : memref<5x128x128xf32, #tpu.memory_space<vmem>>, vector<1x128x128xf32>
    %3 = vector.shape_cast %2 : vector<1x128x128xf32> to vector<128x128xf32>
    %c0_5 = arith.constant 0 : index
    %c0_6 = arith.constant 0 : index
    %c0_7 = arith.constant 0 : index
    %4 = vector.load %arg2[%c0_5, %c0_6, %c0_7] : memref<5x1x128xf32, #tpu.memory_space<vmem>>, vector<1x1x128xf32>
    %5 = vector.shape_cast %4 : vector<1x1x128xf32> to vector<1x128xf32>
    %cst = arith.constant dense<0.000000e+00> : vector<8x128xf32>
    %6 = tpu.matmul %0, %3, %cst {dimension_numbers = #tpu.dot_dimension_numbers<[1], [0], [0], [1], [0, 0, 1, 1], [], []>} : vector<8x128xf32>, vector<128x128xf32>, vector<8x128xf32> -> vector<8x128xf32>
    %7 = vector.broadcast %5 : vector<1x128xf32> to vector<8x128xf32>
    %8 = arith.addf %6, %7 : vector<8x128xf32>
    %cst_8 = arith.constant 0.000000e+00 : f32
    %9 = vector.broadcast %cst_8 : f32 to vector<8x128xf32>
    %10 = arith.maximumf %8, %9 : vector<8x128xf32>
    %c1 = arith.constant 1 : index
    %c0_9 = arith.constant 0 : index
    %c0_10 = arith.constant 0 : index
    %11 = vector.load %arg1[%c1, %c0_9, %c0_10] : memref<5x128x128xf32, #tpu.memory_space<vmem>>, vector<1x128x128xf32>
    %12 = vector.shape_cast %11 : vector<1x128x128xf32> to vector<128x128xf32>
    %c1_11 = arith.constant 1 : index
    %c0_12 = arith.constant 0 : index
    %c0_13 = arith.constant 0 : index
    %13 = vector.load %arg2[%c1_11, %c0_12, %c0_13] : memref<5x1x128xf32, #tpu.memory_space<vmem>>, vector<1x1x128xf32>
    %14 = vector.shape_cast %13 : vector<1x1x128xf32> to vector<1x128xf32>
    %cst_14 = arith.constant dense<0.000000e+00> : vector<8x128xf32>
    %15 = tpu.matmul %10, %12, %cst_14 {dimension_numbers = #tpu.dot_dimension_numbers<[1], [0], [0], [1], [0, 0, 1, 1], [], []>} : vector<8x128xf32>, vector<128x128xf32>, vector<8x128xf32> -> vector<8x128xf32>
    %16 = vector.broadcast %14 : vector<1x128xf32> to vector<8x128xf32>
    %17 = arith.addf %15, %16 : vector<8x128xf32>
    %cst_15 = arith.constant 0.000000e+00 : f32
    %18 = vector.broadcast %cst_15 : f32 to vector<8x128xf32>
    %19 = arith.maximumf %17, %18 : vector<8x128xf32>
    %c0_16 = arith.constant 0 : index
    %c0_17 = arith.constant 0 : index
    %20 = vector.load %arg3[%c0_16, %c0_17] : memref<128x256xf32, #tpu.memory_space<vmem>>, vector<128x256xf32>
    %cst_18 = arith.constant dense<0.000000e+00> : vector<8x256xf32>
    %21 = tpu.matmul %19, %20, %cst_18 {dimension_numbers = #tpu.dot_dimension_numbers<[1], [0], [0], [1], [0, 0, 1, 1], [], []>} : vector<8x128xf32>, vector<128x256xf32>, vector<8x256xf32> -> vector<8x256xf32>
    %c0_19 = arith.constant 0 : index
    %c0_20 = arith.constant 0 : index
    %22 = vector.load %arg4[%c0_19, %c0_20] : memref<1x256xf32, #tpu.memory_space<vmem>>, vector<1x256xf32>
    %23 = vector.broadcast %22 : vector<1x256xf32> to vector<8x256xf32>
    %24 = arith.addf %21, %23 : vector<8x256xf32>
    %25 = vector.extract_strided_slice %24 {offsets = [0, 0], sizes = [8, 128], strides = [1, 1]} : vector<8x256xf32> to vector<8x128xf32>
    %26 = vector.extract_strided_slice %24 {offsets = [0, 128], sizes = [8, 128], strides = [1, 1]} : vector<8x256xf32> to vector<8x128xf32>
    %cst_21 = arith.constant 5.000000e-01 : f32
    %27 = vector.broadcast %cst_21 : f32 to vector<8x128xf32>
    %28 = arith.mulf %27, %26 : vector<8x128xf32>
    %29 = math.exp %28 : vector<8x128xf32>
    %30 = arith.mulf %1, %29 : vector<8x128xf32>
    %31 = arith.addf %25, %30 : vector<8x128xf32>
    %c2 = arith.constant 2 : index
    %c0_22 = arith.constant 0 : index
    %c0_23 = arith.constant 0 : index
    %32 = vector.load %arg1[%c2, %c0_22, %c0_23] : memref<5x128x128xf32, #tpu.memory_space<vmem>>, vector<1x128x128xf32>
    %33 = vector.shape_cast %32 : vector<1x128x128xf32> to vector<128x128xf32>
    %c2_24 = arith.constant 2 : index
    %c0_25 = arith.constant 0 : index
    %c0_26 = arith.constant 0 : index
    %34 = vector.load %arg2[%c2_24, %c0_25, %c0_26] : memref<5x1x128xf32, #tpu.memory_space<vmem>>, vector<1x1x128xf32>
    %35 = vector.shape_cast %34 : vector<1x1x128xf32> to vector<1x128xf32>
    %cst_27 = arith.constant dense<0.000000e+00> : vector<8x128xf32>
    %36 = tpu.matmul %31, %33, %cst_27 {dimension_numbers = #tpu.dot_dimension_numbers<[1], [0], [0], [1], [0, 0, 1, 1], [], []>} : vector<8x128xf32>, vector<128x128xf32>, vector<8x128xf32> -> vector<8x128xf32>
    %37 = vector.broadcast %35 : vector<1x128xf32> to vector<8x128xf32>
    %38 = arith.addf %36, %37 : vector<8x128xf32>
    %cst_28 = arith.constant 0.000000e+00 : f32
    %39 = vector.broadcast %cst_28 : f32 to vector<8x128xf32>
    %40 = arith.maximumf %38, %39 : vector<8x128xf32>
    %c3 = arith.constant 3 : index
    %c0_29 = arith.constant 0 : index
    %c0_30 = arith.constant 0 : index
    %41 = vector.load %arg1[%c3, %c0_29, %c0_30] : memref<5x128x128xf32, #tpu.memory_space<vmem>>, vector<1x128x128xf32>
    %42 = vector.shape_cast %41 : vector<1x128x128xf32> to vector<128x128xf32>
    %c3_31 = arith.constant 3 : index
    %c0_32 = arith.constant 0 : index
    %c0_33 = arith.constant 0 : index
    %43 = vector.load %arg2[%c3_31, %c0_32, %c0_33] : memref<5x1x128xf32, #tpu.memory_space<vmem>>, vector<1x1x128xf32>
    %44 = vector.shape_cast %43 : vector<1x1x128xf32> to vector<1x128xf32>
    %cst_34 = arith.constant dense<0.000000e+00> : vector<8x128xf32>
    %45 = tpu.matmul %40, %42, %cst_34 {dimension_numbers = #tpu.dot_dimension_numbers<[1], [0], [0], [1], [0, 0, 1, 1], [], []>} : vector<8x128xf32>, vector<128x128xf32>, vector<8x128xf32> -> vector<8x128xf32>
    %46 = vector.broadcast %44 : vector<1x128xf32> to vector<8x128xf32>
    %47 = arith.addf %45, %46 : vector<8x128xf32>
    %cst_35 = arith.constant 0.000000e+00 : f32
    %48 = vector.broadcast %cst_35 : f32 to vector<8x128xf32>
    %49 = arith.maximumf %47, %48 : vector<8x128xf32>
    %c4 = arith.constant 4 : index
    %c0_36 = arith.constant 0 : index
    %c0_37 = arith.constant 0 : index
    %50 = vector.load %arg1[%c4, %c0_36, %c0_37] : memref<5x128x128xf32, #tpu.memory_space<vmem>>, vector<1x128x128xf32>
    %51 = vector.shape_cast %50 : vector<1x128x128xf32> to vector<128x128xf32>
    %c4_38 = arith.constant 4 : index
    %c0_39 = arith.constant 0 : index
    %c0_40 = arith.constant 0 : index
    %52 = vector.load %arg2[%c4_38, %c0_39, %c0_40] : memref<5x1x128xf32, #tpu.memory_space<vmem>>, vector<1x1x128xf32>
    %53 = vector.shape_cast %52 : vector<1x1x128xf32> to vector<1x128xf32>
    %cst_41 = arith.constant dense<0.000000e+00> : vector<8x128xf32>
    %54 = tpu.matmul %49, %51, %cst_41 {dimension_numbers = #tpu.dot_dimension_numbers<[1], [0], [0], [1], [0, 0, 1, 1], [], []>} : vector<8x128xf32>, vector<128x128xf32>, vector<8x128xf32> -> vector<8x128xf32>
    %55 = vector.broadcast %53 : vector<1x128xf32> to vector<8x128xf32>
    %56 = arith.addf %54, %55 : vector<8x128xf32>
    %57 = arith.negf %56 : vector<8x128xf32>
    %58 = math.exp %57 : vector<8x128xf32>
    %cst_42 = arith.constant 1.000000e+00 : f32
    %59 = vector.broadcast %cst_42 : f32 to vector<8x128xf32>
    %60 = arith.addf %59, %58 : vector<8x128xf32>
    %61 = arith.divf %59, %60 : vector<8x128xf32>
    %c0_43 = arith.constant 0 : index
    %c0_44 = arith.constant 0 : index
    %62 = vector.load %arg5[%c0_43, %c0_44] : memref<8x512xf32, #tpu.memory_space<vmem>>, vector<8x128xf32>
    tpu.vector_store %arg5[%c0_43, %c0_44], %61 {strides = array<i32>} : memref<8x512xf32, #tpu.memory_space<vmem>>, vector<8x128xf32>,
    %c0_45 = arith.constant 0 : index
    %c128_46 = arith.constant 128 : index
    %63 = vector.load %arg5[%c0_45, %c128_46] : memref<8x512xf32, #tpu.memory_space<vmem>>, vector<8x128xf32>
    tpu.vector_store %arg5[%c0_45, %c128_46], %25 {strides = array<i32>} : memref<8x512xf32, #tpu.memory_space<vmem>>, vector<8x128xf32>,
    %c0_47 = arith.constant 0 : index
    %c256 = arith.constant 256 : index
    %64 = vector.load %arg5[%c0_47, %c256] : memref<8x512xf32, #tpu.memory_space<vmem>>, vector<8x128xf32>
    tpu.vector_store %arg5[%c0_47, %c256], %26 {strides = array<i32>} : memref<8x512xf32, #tpu.memory_space<vmem>>, vector<8x128xf32>,
    %c0_48 = arith.constant 0 : index
    %c384 = arith.constant 384 : index
    %65 = vector.load %arg5[%c0_48, %c384] : memref<8x512xf32, #tpu.memory_space<vmem>>, vector<8x128xf32>
    tpu.vector_store %arg5[%c0_48, %c384], %31 {strides = array<i32>} : memref<8x512xf32, #tpu.memory_space<vmem>>, vector<8x128xf32>,
    return
  }
}

</mosaic_0001>

<llo_original>
// kernel: forward.1
$region0: #{forward.1}
  #allocation0 [shape = 'u32[]', space=smem, size = 0x4, offset = 0x4, fixed_abs, tag = 'smem constant byte address 0x4 - core index']
  #allocation1 [shape = 'u32[72,128]{1,0:T(1,128)}', space=vmem, size = 0x9000, scoped, tag = 'internal scratch']
  %s0 = inlined_call_operand.vmem [shape: f32[8,256], index: 0, kind: input, shape index: {}]
  %s1 = inlined_call_operand.hbm [shape: f32[5,128,128], index: 1, kind: input, shape index: {}]
  %s2 = inlined_call_operand.vmem [shape: f32[5,1,128], index: 2, kind: input, shape index: {}]
  %s3 = inlined_call_operand.hbm [shape: f32[128,256], index: 3, kind: input, shape index: {}]
  %s4 = inlined_call_operand.vmem [shape: f32[1,256], index: 4, kind: input, shape index: {}]
  %s5 = inlined_call_operand.vmem [shape: f32[8,512], index: 5, kind: output, shape index: {}]
  %s6 = sld [smem:[#allocation0]]
  $region38: #{forward.1} parent=0
    _
  %s8 = ssub.s32 1, %s6
  %s9 = scalar_select 0, %s8, %s6
  $region1: #{forward.1} parent=0
    #allocation2 [shape = 'u8[327680]{0}', space=vmem, size = 0x50000, scoped, tag = 'input window, operand 1, single buffered']
    #allocation3 [shape = 's32[1]{0}', space=sflag, size = 0x4, scoped, tag = 'scoped memory for forward.1']
    #allocation4 [shape = 'u8[131072]{0}', space=vmem, size = 0x20000, scoped, tag = 'input window, operand 3, single buffered']
    #allocation5 [shape = 's32[1]{0}', space=sflag, size = 0x4, scoped, tag = 'scoped memory for forward.1']
    %10 = vsyncpa [#allocation3], 0
    %11 = vsyncpa [#allocation5], 0
    // Predicated region
    $region2: #{forward.1} parent=1 // pred_check
      _
    $region3: #{forward.1} parent=1 // pred_check_branch
      %13 = sbr.rel (0) target = $region5
    $region4: #{forward.1} parent=1 // pred_region
      _
    $region5: #{forward.1} parent=1 // pred_fallthru
      _
    // Predicated region
    $region6: #{forward.1} parent=1 // pred_check
      _
    $region7: #{forward.1} parent=1 // pred_check_branch
      %15 = sbr.rel (0) target = $region9
    $region8: #{forward.1} parent=1 // pred_region
      %17 = vsyncadd [#allocation3], 0
      %s18 = sshll.u32 %s1, 4
      %s19 = int_to_ptr.hbm [resolvable:$true] %s18
      %s20 = sshll.u32 [#allocation2], 4
      %s21 = int_to_ptr.vmem [resolvable:$true] %s20
      %26 = dma.hbm_to_vmem [thread:$0]  %s19, 10240, %s21, [#allocation3], 128, 128, 8
    $region9: #{forward.1} parent=1 // pred_fallthru
      _
    // Predicated region
    $region10: #{forward.1} parent=1 // pred_check
      _
    $region11: #{forward.1} parent=1 // pred_check_branch
      %28 = sbr.rel (0) target = $region13
    $region12: #{forward.1} parent=1 // pred_region
      _
    $region13: #{forward.1} parent=1 // pred_fallthru
      _
    // Predicated region
    $region14: #{forward.1} parent=1 // pred_check
      _
    $region15: #{forward.1} parent=1 // pred_check_branch
      %30 = sbr.rel (0) target = $region17
    $region16: #{forward.1} parent=1 // pred_region
      %32 = vsyncadd [#allocation5], 0
      %s33 = sshll.u32 %s3, 4
      %s34 = int_to_ptr.hbm [resolvable:$true] %s33
      %s35 = sshll.u32 [#allocation4], 4
      %s36 = int_to_ptr.vmem [resolvable:$true] %s35
      %41 = dma.hbm_to_vmem [thread:$0]  %s34, 4096, %s36, [#allocation5], 256, 256, 16
    $region17: #{forward.1} parent=1 // pred_fallthru
      _
    // Predicated region
    $region18: #{forward.1} parent=1 // pred_check
      _
    $region19: #{forward.1} parent=1 // pred_check_branch
      %43 = sbr.rel (0) target = $region21
    $region20: #{forward.1} parent=1 // pred_region
      _
    $region21: #{forward.1} parent=1 // pred_fallthru
      _
    // Predicated region
    $region22: #{forward.1} parent=1 // pred_check
      _
    $region23: #{forward.1} parent=1 // pred_check_branch
      %45 = sbr.rel (0) target = $region25
    $region24: #{forward.1} parent=1 // pred_region
      %47 = dma.done [#allocation3], 10240
    $region25: #{forward.1} parent=1 // pred_fallthru
      _
    // Predicated region
    $region26: #{forward.1} parent=1 // pred_check
      _
    $region27: #{forward.1} parent=1 // pred_check_branch
      %49 = sbr.rel (0) target = $region29
    $region28: #{forward.1} parent=1 // pred_region
      %51 = dma.done [#allocation5], 4096
    $region29: #{forward.1} parent=1 // pred_fallthru
      _
    %v52 = vld [vmem:[%s0] sm:$0xff]
    %v53 = vld [vmem:[%s0 + $0x8] sm:$0xff]
    %v54 = vld [vmem:[#allocation2] sm:$0xff]
    %v55 = vld [vmem:[#allocation2 + $0x8] sm:$0xff]
    %v56 = vld [vmem:[#allocation2 + $0x10] sm:$0xff]
    %v57 = vld [vmem:[#allocation2 + $0x18] sm:$0xff]
    %v58 = vld [vmem:[#allocation2 + $0x20] sm:$0xff]
    %v59 = vld [vmem:[#allocation2 + $0x28] sm:$0xff]
    %v60 = vld [vmem:[#allocation2 + $0x30] sm:$0xff]
    %v61 = vld [vmem:[#allocation2 + $0x38] sm:$0xff]
    %v62 = vld [vmem:[#allocation2 + $0x40] sm:$0xff]
    %v63 = vld [vmem:[#allocation2 + $0x48] sm:$0xff]
    %v64 = vld [vmem:[#allocation2 + $0x50] sm:$0xff]
    %v65 = vld [vmem:[#allocation2 + $0x58] sm:$0xff]
    %v66 = vld [vmem:[#allocation2 + $0x60] sm:$0xff]
    %v67 = vld [vmem:[#allocation2 + $0x68] sm:$0xff]
    %v68 = vld [vmem:[#allocation2 + $0x70] sm:$0xff]
    %v69 = vld [vmem:[#allocation2 + $0x78] sm:$0xff]
    %v70 = vld [vmem:[%s2] sm:$0x1]
    %v72 = vperm.slane %v70, 0
    %74 = vmatpush.msra.mxu0 %v69
    %75 = vmatpush.msra.mxu0 %v68
    %76 = vmatpush.msra.mxu0 %v67
    %77 = vmatpush.msra.mxu0 %v66
    %78 = vmatpush.msra.mxu0 %v65
    %79 = vmatpush.msra.mxu0 %v64
    %80 = vmatpush.msra.mxu0 %v63
    %81 = vmatpush.msra.mxu0 %v62
    %82 = vmatpush.msra.mxu0 %v61
    %83 = vmatpush.msra.mxu0 %v60
    %84 = vmatpush.msra.mxu0 %v59
    %85 = vmatpush.msra.mxu0 %v58
    %86 = vmatpush.msra.mxu0 %v57
    %87 = vmatpush.msra.mxu0 %v56
    %88 = vmatpush.msra.mxu0 %v55
    %89 = vmatpush.msra.mxu0 %v54
    %90 = vmatmul.f32.gmra.mxu0 %v52
    %v91 = vpop.f32.mrf.mxu0
    %v92 = vadd.f32 %v72, %v91
    %93 = vdwg.mxu0
    %v94 = vmax.f32 %v92, 0.0
    %s95 = scalar_lea.vmem [#allocation2], 128
    %v96 = vld [vmem:[%s95] sm:$0xff]
    %v97 = vld [vmem:[%s95 + $0x8] sm:$0xff]
    %v98 = vld [vmem:[%s95 + $0x10] sm:$0xff]
    %v99 = vld [vmem:[%s95 + $0x18] sm:$0xff]
    %v100 = vld [vmem:[%s95 + $0x20] sm:$0xff]
    %v101 = vld [vmem:[%s95 + $0x28] sm:$0xff]
    %v102 = vld [vmem:[%s95 + $0x30] sm:$0xff]
    %v103 = vld [vmem:[%s95 + $0x38] sm:$0xff]
    %v104 = vld [vmem:[%s95 + $0x40] sm:$0xff]
    %v105 = vld [vmem:[%s95 + $0x48] sm:$0xff]
    %v106 = vld [vmem:[%s95 + $0x50] sm:$0xff]
    %v107 = vld [vmem:[%s95 + $0x58] sm:$0xff]
    %v108 = vld [vmem:[%s95 + $0x60] sm:$0xff]
    %v109 = vld [vmem:[%s95 + $0x68] sm:$0xff]
    %v110 = vld [vmem:[%s95 + $0x70] sm:$0xff]
    %v111 = vld [vmem:[%s95 + $0x78] sm:$0xff]
    %s112 = scalar_lea.vmem %s2, 1
    %v113 = vld [vmem:[%s112] sm:$0x1]
    %v115 = vperm.slane %v113, 0
    %117 = vmatpush.msra.mxu0 %v111
    %118 = vmatpush.msra.mxu0 %v110
    %119 = vmatpush.msra.mxu0 %v109
    %120 = vmatpush.msra.mxu0 %v108
    %121 = vmatpush.msra.mxu0 %v107
    %122 = vmatpush.msra.mxu0 %v106
    %123 = vmatpush.msra.mxu0 %v105
    %124 = vmatpush.msra.mxu0 %v104
    %125 = vmatpush.msra.mxu0 %v103
    %126 = vmatpush.msra.mxu0 %v102
    %127 = vmatpush.msra.mxu0 %v101
    %128 = vmatpush.msra.mxu0 %v100
    %129 = vmatpush.msra.mxu0 %v99
    %130 = vmatpush.msra.mxu0 %v98
    %131 = vmatpush.msra.mxu0 %v97
    %132 = vmatpush.msra.mxu0 %v96
    %133 = vmatmul.f32.gmra.mxu0 %v94
    %v134 = vpop.f32.mrf.mxu0
    %v135 = vadd.f32 %v115, %v134
    %136 = vdwg.mxu0
    %v137 = vmax.f32 %v135, 0.0
    %v138 = vld [vmem:[#allocation4] sm:$0xff]
    %v139 = vld [vmem:[#allocation4 + $0x8] sm:$0xff]
    %v140 = vld [vmem:[#allocation4 + $0x10] sm:$0xff]
    %v141 = vld [vmem:[#allocation4 + $0x18] sm:$0xff]
    %v142 = vld [vmem:[#allocation4 + $0x20] sm:$0xff]
    %v143 = vld [vmem:[#allocation4 + $0x28] sm:$0xff]
    %v144 = vld [vmem:[#allocation4 + $0x30] sm:$0xff]
    %v145 = vld [vmem:[#allocation4 + $0x38] sm:$0xff]
    %v146 = vld [vmem:[#allocation4 + $0x40] sm:$0xff]
    %v147 = vld [vmem:[#allocation4 + $0x48] sm:$0xff]
    %v148 = vld [vmem:[#allocation4 + $0x50] sm:$0xff]
    %v149 = vld [vmem:[#allocation4 + $0x58] sm:$0xff]
    %v150 = vld [vmem:[#allocation4 + $0x60] sm:$0xff]
    %v151 = vld [vmem:[#allocation4 + $0x68] sm:$0xff]
    %v152 = vld [vmem:[#allocation4 + $0x70] sm:$0xff]
    %v153 = vld [vmem:[#allocation4 + $0x78] sm:$0xff]
    %v154 = vld [vmem:[#allocation4 + $0x80] sm:$0xff]
    %v155 = vld [vmem:[#allocation4 + $0x88] sm:$0xff]
    %v156 = vld [vmem:[#allocation4 + $0x90] sm:$0xff]
    %v157 = vld [vmem:[#allocation4 + $0x98] sm:$0xff]
    %v158 = vld [vmem:[#allocation4 + $0xa0] sm:$0xff]
    %v159 = vld [vmem:[#allocation4 + $0xa8] sm:$0xff]
    %v160 = vld [vmem:[#allocation4 + $0xb0] sm:$0xff]
    %v161 = vld [vmem:[#allocation4 + $0xb8] sm:$0xff]
    %v162 = vld [vmem:[#allocation4 + $0xc0] sm:$0xff]
    %v163 = vld [vmem:[#allocation4 + $0xc8] sm:$0xff]
    %v164 = vld [vmem:[#allocation4 + $0xd0] sm:$0xff]
    %v165 = vld [vmem:[#allocation4 + $0xd8] sm:$0xff]
    %v166 = vld [vmem:[#allocation4 + $0xe0] sm:$0xff]
    %v167 = vld [vmem:[#allocation4 + $0xe8] sm:$0xff]
    %v168 = vld [vmem:[#allocation4 + $0xf0] sm:$0xff]
    %v169 = vld [vmem:[#allocation4 + $0xf8] sm:$0xff]
    %v170 = vld [vmem:[%s4] sm:$0x3]
    %v172 = vperm.slane %v170, 0
    %v173 = vperm.slane %v170, 1
    %176 = vmatpush.msra.mxu0 %v168
    %177 = vmatpush.msra.mxu0 %v166
    %178 = vmatpush.msra.mxu0 %v164
    %179 = vmatpush.msra.mxu0 %v162
    %180 = vmatpush.msra.mxu0 %v160
    %181 = vmatpush.msra.mxu0 %v158
    %182 = vmatpush.msra.mxu0 %v156
    %183 = vmatpush.msra.mxu0 %v154
    %184 = vmatpush.msra.mxu0 %v152
    %185 = vmatpush.msra.mxu0 %v150
    %186 = vmatpush.msra.mxu0 %v148
    %187 = vmatpush.msra.mxu0 %v146
    %188 = vmatpush.msra.mxu0 %v144
    %189 = vmatpush.msra.mxu0 %v142
    %190 = vmatpush.msra.mxu0 %v140
    %191 = vmatpush.msra.mxu0 %v138
    %192 = vmatmul.f32.gmra.mxu0 %v137
    %v193 = vpop.f32.mrf.mxu0
    %v194 = vadd.f32 %v172, %v193
    %195 = vdwg.mxu0
    %196 = vmatpush.msra.mxu0 %v169
    %197 = vmatpush.msra.mxu0 %v167
    %198 = vmatpush.msra.mxu0 %v165
    %199 = vmatpush.msra.mxu0 %v163
    %200 = vmatpush.msra.mxu0 %v161
    %201 = vmatpush.msra.mxu0 %v159
    %202 = vmatpush.msra.mxu0 %v157
    %203 = vmatpush.msra.mxu0 %v155
    %204 = vmatpush.msra.mxu0 %v153
    %205 = vmatpush.msra.mxu0 %v151
    %206 = vmatpush.msra.mxu0 %v149
    %207 = vmatpush.msra.mxu0 %v147
    %208 = vmatpush.msra.mxu0 %v145
    %209 = vmatpush.msra.mxu0 %v143
    %210 = vmatpush.msra.mxu0 %v141
    %211 = vmatpush.msra.mxu0 %v139
    %212 = vmatmul.f32.gmra.mxu0 %v137
    %v213 = vpop.f32.mrf.mxu0
    %v214 = vadd.f32 %v173, %v213
    %215 = vdwg.mxu0
    %v216 = vmul.f32 %v214, 0.5
    %v217 = vmul.f32 %v216, 1.442695
    %v218 = vpow.pop %v217
    %v219 = vmul.f32 %v53, %v218
    %v220 = vadd.f32 %v194, %v219
    %s221 = scalar_lea.vmem [#allocation2], 256
    %v222 = vld [vmem:[%s221] sm:$0xff]
    %v223 = vld [vmem:[%s221 + $0x8] sm:$0xff]
    %v224 = vld [vmem:[%s221 + $0x10] sm:$0xff]
    %v225 = vld [vmem:[%s221 + $0x18] sm:$0xff]
    %v226 = vld [vmem:[%s221 + $0x20] sm:$0xff]
    %v227 = vld [vmem:[%s221 + $0x28] sm:$0xff]
    %v228 = vld [vmem:[%s221 + $0x30] sm:$0xff]
    %v229 = vld [vmem:[%s221 + $0x38] sm:$0xff]
    %v230 = vld [vmem:[%s221 + $0x40] sm:$0xff]
    %v231 = vld [vmem:[%s221 + $0x48] sm:$0xff]
    %v232 = vld [vmem:[%s221 + $0x50] sm:$0xff]
    %v233 = vld [vmem:[%s221 + $0x58] sm:$0xff]
    %v234 = vld [vmem:[%s221 + $0x60] sm:$0xff]
    %v235 = vld [vmem:[%s221 + $0x68] sm:$0xff]
    %v236 = vld [vmem:[%s221 + $0x70] sm:$0xff]
    %v237 = vld [vmem:[%s221 + $0x78] sm:$0xff]
    %s238 = scalar_lea.vmem %s2, 2
    %v239 = vld [vmem:[%s238] sm:$0x1]
    %v241 = vperm.slane %v239, 0
    %243 = vmatpush.msra.mxu0 %v237
    %244 = vmatpush.msra.mxu0 %v236
    %245 = vmatpush.msra.mxu0 %v235
    %246 = vmatpush.msra.mxu0 %v234
    %247 = vmatpush.msra.mxu0 %v233
    %248 = vmatpush.msra.mxu0 %v232
    %249 = vmatpush.msra.mxu0 %v231
    %250 = vmatpush.msra.mxu0 %v230
    %251 = vmatpush.msra.mxu0 %v229
    %252 = vmatpush.msra.mxu0 %v228
    %253 = vmatpush.msra.mxu0 %v227
    %254 = vmatpush.msra.mxu0 %v226
    %255 = vmatpush.msra.mxu0 %v225
    %256 = vmatpush.msra.mxu0 %v224
    %257 = vmatpush.msra.mxu0 %v223
    %258 = vmatpush.msra.mxu0 %v222
    %259 = vmatmul.f32.gmra.mxu0 %v220
    %v260 = vpop.f32.mrf.mxu0
    %v261 = vadd.f32 %v241, %v260
    %262 = vdwg.mxu0
    %v263 = vmax.f32 %v261, 0.0
    %s264 = scalar_lea.vmem [#allocation2], 384
    %v265 = vld [vmem:[%s264] sm:$0xff]
    %v266 = vld [vmem:[%s264 + $0x8] sm:$0xff]
    %v267 = vld [vmem:[%s264 + $0x10] sm:$0xff]
    %v268 = vld [vmem:[%s264 + $0x18] sm:$0xff]
    %v269 = vld [vmem:[%s264 + $0x20] sm:$0xff]
    %v270 = vld [vmem:[%s264 + $0x28] sm:$0xff]
    %v271 = vld [vmem:[%s264 + $0x30] sm:$0xff]
    %v272 = vld [vmem:[%s264 + $0x38] sm:$0xff]
    %v273 = vld [vmem:[%s264 + $0x40] sm:$0xff]
    %v274 = vld [vmem:[%s264 + $0x48] sm:$0xff]
    %v275 = vld [vmem:[%s264 + $0x50] sm:$0xff]
    %v276 = vld [vmem:[%s264 + $0x58] sm:$0xff]
    %v277 = vld [vmem:[%s264 + $0x60] sm:$0xff]
    %v278 = vld [vmem:[%s264 + $0x68] sm:$0xff]
    %v279 = vld [vmem:[%s264 + $0x70] sm:$0xff]
    %v280 = vld [vmem:[%s264 + $0x78] sm:$0xff]
    %s281 = scalar_lea.vmem %s2, 3
    %v282 = vld [vmem:[%s281] sm:$0x1]
    %v284 = vperm.slane %v282, 0
    %286 = vmatpush.msra.mxu0 %v280
    %287 = vmatpush.msra.mxu0 %v279
    %288 = vmatpush.msra.mxu0 %v278
    %289 = vmatpush.msra.mxu0 %v277
    %290 = vmatpush.msra.mxu0 %v276
    %291 = vmatpush.msra.mxu0 %v275
    %292 = vmatpush.msra.mxu0 %v274
    %293 = vmatpush.msra.mxu0 %v273
    %294 = vmatpush.msra.mxu0 %v272
    %295 = vmatpush.msra.mxu0 %v271
    %296 = vmatpush.msra.mxu0 %v270
    %297 = vmatpush.msra.mxu0 %v269
    %298 = vmatpush.msra.mxu0 %v268
    %299 = vmatpush.msra.mxu0 %v267
    %300 = vmatpush.msra.mxu0 %v266
    %301 = vmatpush.msra.mxu0 %v265
    %302 = vmatmul.f32.gmra.mxu0 %v263
    %v303 = vpop.f32.mrf.mxu0
    %v304 = vadd.f32 %v284, %v303
    %305 = vdwg.mxu0
    %v306 = vmax.f32 %v304, 0.0
    %s307 = scalar_lea.vmem [#allocation2], 512
    %v308 = vld [vmem:[%s307] sm:$0xff]
    %v309 = vld [vmem:[%s307 + $0x8] sm:$0xff]
    %v310 = vld [vmem:[%s307 + $0x10] sm:$0xff]
    %v311 = vld [vmem:[%s307 + $0x18] sm:$0xff]
    %v312 = vld [vmem:[%s307 + $0x20] sm:$0xff]
    %v313 = vld [vmem:[%s307 + $0x28] sm:$0xff]
    %v314 = vld [vmem:[%s307 + $0x30] sm:$0xff]
    %v315 = vld [vmem:[%s307 + $0x38] sm:$0xff]
    %v316 = vld [vmem:[%s307 + $0x40] sm:$0xff]
    %v317 = vld [vmem:[%s307 + $0x48] sm:$0xff]
    %v318 = vld [vmem:[%s307 + $0x50] sm:$0xff]
    %v319 = vld [vmem:[%s307 + $0x58] sm:$0xff]
    %v320 = vld [vmem:[%s307 + $0x60] sm:$0xff]
    %v321 = vld [vmem:[%s307 + $0x68] sm:$0xff]
    %v322 = vld [vmem:[%s307 + $0x70] sm:$0xff]
    %v323 = vld [vmem:[%s307 + $0x78] sm:$0xff]
    %s324 = scalar_lea.vmem %s2, 4
    %v325 = vld [vmem:[%s324] sm:$0x1]
    %v327 = vperm.slane %v325, 0
    %329 = vmatpush.msra.mxu0 %v323
    %330 = vmatpush.msra.mxu0 %v322
    %331 = vmatpush.msra.mxu0 %v321
    %332 = vmatpush.msra.mxu0 %v320
    %333 = vmatpush.msra.mxu0 %v319
    %334 = vmatpush.msra.mxu0 %v318
    %335 = vmatpush.msra.mxu0 %v317
    %336 = vmatpush.msra.mxu0 %v316
    %337 = vmatpush.msra.mxu0 %v315
    %338 = vmatpush.msra.mxu0 %v314
    %339 = vmatpush.msra.mxu0 %v313
    %340 = vmatpush.msra.mxu0 %v312
    %341 = vmatpush.msra.mxu0 %v311
    %342 = vmatpush.msra.mxu0 %v310
    %343 = vmatpush.msra.mxu0 %v309
    %344 = vmatpush.msra.mxu0 %v308
    %345 = vmatmul.f32.gmra.mxu0 %v306
    %v346 = vpop.f32.mrf.mxu0
    %v347 = vadd.f32 %v327, %v346
    %348 = vdwg.mxu0
    %v349 = vxor.u32 %v347, 2147483648
    %v350 = vmul.f32 %v349, 1.442695
    %v351 = vpow.pop %v350
    %v352 = vadd.f32 %v351, 1.0
    %v353 = vrcp.pop %v352
    %v354 = vmul.f32 %v352, %v353
    %v355 = vsub.f32 1.0, %v354
    %v356 = vmul.f32 %v353, %v355
    %v357 = vadd.f32 %v353, %v356
    %vm358 = vweird.f32 %v352
    %vm359 = vweird.f32 %v353
    %vm360 = vmor %vm358, %vm359
    %v361 = vsel %vm360, %v353, %v357
    %v362 = vand.u32 2147483647, %v352
    %vm363 = vcmp.eq.f32.partialorder %v362, 8.507059e+37
    %v364 = vand.u32 %v352, 2147483648
    %v365 = vor.u32 1.1754944e-38, %v364
    %v366 = vsel %vm363, %v365, %v361
    %v367 = vmul.f32 1.0, %v366
    %368 = vst [vmem:[%s5] sm:$0xff] %v367
    %369 = vst [vmem:[%s5 + $0x8] sm:$0xff] %v194
    %370 = vst [vmem:[%s5 + $0x10] sm:$0xff] %v214
    %371 = vst [vmem:[%s5 + $0x18] sm:$0xff] %v220
    // Predicated region
    $region30: #{forward.1} parent=1 // pred_check
      _
    $region31: #{forward.1} parent=1 // pred_check_branch
      %373 = sbr.rel (0) target = $region33
    $region32: #{forward.1} parent=1 // pred_region
      _
    $region33: #{forward.1} parent=1 // pred_fallthru
      _
    // Predicated region
    $region34: #{forward.1} parent=1 // pred_check
      _
    $region35: #{forward.1} parent=1 // pred_check_branch
      %375 = sbr.rel (0) target = $region37
    $region36: #{forward.1} parent=1 // pred_region
      _
    $region37: #{forward.1} parent=1 // pred_fallthru
      _
    %376 = vsyncpa [#allocation3], 1
    %377 = vsyncpa [#allocation5], 1

</llo_original>
